<compile_context>
chip_gen: v7x
topology: tpu7x:2x2x1
jax: 0.10.0
libtpu: 0.0.40
codegen_flags: <defaults>
</compile_context>

<pallas_src>
import jax
import jax.numpy as jnp
import numpy as np
from jax.experimental import pallas as pl
from jax.experimental.pallas import tpu as pltpu


def _cdiv(a: int, b: int) -> int:
    return (a + b - 1) // b


def _pick_tile_and_vmem(in_dim: int, out_dim: int):
    """Row-tile (over in_dim) and scoped-VMEM budget sized from the chip."""
    try:
        vmem_cap = int(pltpu.get_tpu_info().vmem_capacity_bytes)
    except Exception:
        vmem_cap = 64 * 1024 * 1024          # conservative: v7x physical VMEM
    # Leave headroom for compiler scratch / pipelining; cap well under 128 MiB.
    budget = min(int(vmem_cap * 3 // 4), 112 * 1024 * 1024)

    # Per in_dim row of a tile we hold ~14 f32 copies of the out_dim axis:
    # 3 weight-sized inputs (w_m, w_logv, eps) double-buffered, w output
    # double-buffered, plus elementwise temporaries (w, e, p) and slack.
    per_row_bytes = 14 * out_dim * 4
    tile = (budget // per_row_bytes) // 128 * 128
    tile = max(128, min(tile, 2048))          # lane-dense x blocks, DMA-sized
    if in_dim <= tile:
        tile = in_dim                         # full dim -> no (8,128) issue
    # TODO(synk): out_dim large enough that a 128-row tile overflows VMEM would
    # need a two-pass (tiled out_dim) softmax; not needed for these models.
    return tile, budget


def _make_decoder_kernel(in_dim: int, tile_in: int, tiles_per_core: int):
    """One grid step = one row-tile of w (tile_in rows, full out_dim)."""

    def kernel(x_ref, w_m_ref, w_logv_ref, eps_ref, mean_ref, w_ref):
        c = pl.program_id(0)                  # parallel (megacore) axis
        i = pl.program_id(1)                  # in_dim reduction axis
        g = c * tiles_per_core + i            # UNclamped global row-tile index
        row0 = g * tile_in                    # first global in_dim row of tile

        # reparameterize: w = w_m + eps * sqrt(exp(w_logv)) = w_m + eps*exp(.5*logv)
        # Rows past in_dim (ragged tail / clamped duplicate tile) may hold
        # garbage (Inf/NaN); they are masked below and their HBM writeback is
        # clipped to the real in_dim by Pallas.
        w_raw = w_m_ref[...] + eps_ref[...] * jnp.exp(0.5 * w_logv_ref[...])
        w_ref[...] = w_raw                    # reuse output block as the
                                              # softmax materialization buffer

        rows = jax.lax.broadcasted_iota(jnp.int32, w_ref.shape, 0) + row0
        w = jnp.where(rows < in_dim, w_ref[...], 0.0)   # kill garbage rows

        # Row softmax over the full out_dim axis.
        w_max = jnp.max(w, axis=1, keepdims=True)
        e = jnp.exp(w - w_max)
        p = e * (1.0 / jnp.sum(e, axis=1, keepdims=True))

        # Zero x columns past in_dim (they pair with the masked w rows above,
        # and also zero the whole contribution of a duplicated clamped tile).
        cols = jax.lax.broadcasted_iota(jnp.int32, x_ref.shape, 1) + row0
        xv = jnp.where(cols < in_dim, x_ref[...], 0.0)

        # mean accumulates across the in_dim reduction axis; the mean BlockSpec
        # returns the same block for every i, so it stays resident in VMEM.
        @pl.when(i == 0)
        def _():
            mean_ref[...] = jnp.zeros_like(mean_ref)

        mean_ref[...] += jnp.dot(xv, p, preferred_element_type=jnp.float32)[None]

    return kernel


def decoder_mean_and_w(x, w_m, w_logv, eps):
    """Returns (mean [B, out_dim], w [in_dim, out_dim]) via one Pallas kernel."""
    B, in_dim = x.shape
    out_dim = w_m.shape[1]

    tile_in, vmem_budget = _pick_tile_and_vmem(in_dim, out_dim)
    n_tiles = _cdiv(in_dim, tile_in)

    # Leading "parallel" axis -> v7x megacore runs both TensorCores (each core
    # produces a partial mean, summed in the wrapper). On v5e/v6e it is just a
    # loop split; the extra partial-mean writeback is B*out_dim f32 (tiny).
    num_cores = 2 if n_tiles >= 2 else 1
    tiles_per_core = _cdiv(n_tiles, num_cores)
    last_tile = n_tiles - 1

    def tile_idx(c, i):
        # Clamp so a possible extra step on core 1 (odd n_tiles) still reads a
        # valid block; its mean contribution is masked out in-kernel via the
        # UNclamped global index, and its w writeback repeats identical bytes.
        return jnp.minimum(c * tiles_per_core + i, last_tile)

    kernel = _make_decoder_kernel(in_dim, tile_in, tiles_per_core)

    flops = 2 * B * in_dim * out_dim + 7 * in_dim * out_dim
    transcendentals = 2 * in_dim * out_dim          # exp(.5*logv) + exp(w-max)
    bytes_accessed = 4 * (B * in_dim + 4 * in_dim * out_dim
                          + num_cores * B * out_dim)

    mean_partial, w = pl.pallas_call(
        kernel,
        out_shape=(
            jax.ShapeDtypeStruct((num_cores, B, out_dim), jnp.float32),
            jax.ShapeDtypeStruct((in_dim, out_dim), jnp.float32),
        ),
        grid=(num_cores, tiles_per_core),
        in_specs=[
            pl.BlockSpec((B, tile_in), lambda c, i: (0, tile_idx(c, i))),        # x
            pl.BlockSpec((tile_in, out_dim), lambda c, i: (tile_idx(c, i), 0)),  # w_m
            pl.BlockSpec((tile_in, out_dim), lambda c, i: (tile_idx(c, i), 0)),  # w_logv
            pl.BlockSpec((tile_in, out_dim), lambda c, i: (tile_idx(c, i), 0)),  # eps
        ],
        out_specs=(
            pl.BlockSpec((1, B, out_dim), lambda c, i: (c, 0, 0)),               # partial mean
            pl.BlockSpec((tile_in, out_dim), lambda c, i: (tile_idx(c, i), 0)),  # w
        ),
        compiler_params=pltpu.CompilerParams(
            dimension_semantics=("parallel", "arbitrary"),
            vmem_limit_bytes=int(vmem_budget),
        ),
        cost_estimate=pl.CostEstimate(
            flops=flops,
            transcendentals=transcendentals,
            bytes_accessed=bytes_accessed,
        ),
    )(x, w_m, w_logv, eps)

    return jnp.sum(mean_partial, axis=0), w


def _reparameterize(key, mu, logv):
    eps = jax.random.normal(key, mu.shape, dtype=mu.dtype)
    return mu + eps * jnp.exp(0.5 * logv)


def make_decoder_params(key, in_dim, out_dim):
    """Deterministic parameter init mirroring the PyTorch __init__ shapes."""
    k_c, k_w = jax.random.split(key)
    f32 = jnp.float32
    return {
        "delta_m": jnp.ones((out_dim,), f32),
        "delta_logv": jnp.log(jnp.ones((out_dim,), f32) * 0.01),
        "tau_m": jnp.ones((in_dim,), f32),
        "tau_logv": jnp.log(jnp.ones((in_dim,), f32) * 0.01),
        "lambda_m": jnp.ones((in_dim * out_dim,), f32),
        "lambda_logv": jnp.log(jnp.ones((in_dim * out_dim,), f32) * 0.01),
        "c_m": jax.random.normal(k_c, (1,), f32),
        "c_logv": jnp.zeros((1,), f32),
        "w_m": jax.random.normal(k_w, (in_dim * out_dim,), f32),
        "w_logv": jnp.zeros((in_dim * out_dim,), f32),
    }


def decoder_forward(params, x, rng_key):
    """Forward pass matching Decoder.forward semantics."""
    B, in_dim = x.shape

    k_delta, k_tau, k_lambda, k_c, k_w = jax.random.split(rng_key, 5)

    # Small elementwise reparameterizations: left to XLA, fused under jit.
    delta = _reparameterize(k_delta, params["delta_m"], params["delta_logv"])[None, :]
    tau = _reparameterize(k_tau, params["tau_m"], params["tau_logv"])[:, None]
    lambd = _reparameterize(k_lambda, params["lambda_m"],
                            params["lambda_logv"]).reshape((in_dim, -1))
    c = _reparameterize(k_c, params["c_m"], params["c_logv"])

    # Hot path: reparameterize w + softmax(dim=1) + matmul in one Pallas kernel.
    w_m_2d = params["w_m"].reshape((in_dim, -1))
    w_logv_2d = params["w_logv"].reshape((in_dim, -1))
    eps_w = jax.random.normal(k_w, w_m_2d.shape, dtype=w_m_2d.dtype)
    mean, w = decoder_mean_and_w(x, w_m_2d, w_logv_2d, eps_w)

    return {
        "mean": mean,
        "delta": delta,
        "tau": tau,
        "lambd": lambd,
        "c": c,
        "w": w,
        "delta_m": params["delta_m"],
        "delta_logv": params["delta_logv"],
        "tau_m": params["tau_m"],
        "tau_logv": params["tau_logv"],
        "lambda_m": params["lambda_m"],
        "lambda_logv": params["lambda_logv"],
        "c_m": params["c_m"],
        "c_logv": params["c_logv"],
        "w_m": params["w_m"],
        "w_logv": params["w_logv"],
    }


if __name__ == "__main__":
    B, IN_DIM, OUT_DIM = 8, 16, 32

    root = jax.random.PRNGKey(0)
    k_params, k_x, k_fwd = jax.random.split(root, 3)

    params = make_decoder_params(k_params, IN_DIM, OUT_DIM)
    x = jax.random.normal(k_x, (B, IN_DIM), dtype=jnp.float32)

    fwd = jax.jit(decoder_forward)
    outputs = fwd(params, x, k_fwd)
    jax.block_until_ready(outputs)

    # Shape checks.
    assert outputs["mean"].shape == (B, OUT_DIM)
    assert outputs["w"].shape == (IN_DIM, OUT_DIM)
    assert outputs["delta"].shape == (1, OUT_DIM)
    assert outputs["tau"].shape == (IN_DIM, 1)
    assert outputs["lambd"].shape == (IN_DIM, OUT_DIM)
    assert outputs["c"].shape == (1,)

    # Exact reparameterization check: eps is drawn from the same key split the
    # forward uses, and w_logv == 0 so w must equal w_m + eps elementwise.
    _, _, _, _, k_w = jax.random.split(k_fwd, 5)
    eps_w = jax.random.normal(k_w, (IN_DIM, OUT_DIM), dtype=jnp.float32)
    expected_w = (params["w_m"].reshape(IN_DIM, OUT_DIM)
                  + eps_w * jnp.exp(0.5 * params["w_logv"].reshape(IN_DIM, OUT_DIM)))
    assert bool(jnp.all(jnp.isfinite(outputs["w"])))
    assert jnp.allclose(outputs["w"], expected_w, atol=1e-5, rtol=1e-5)

    # mean = x @ softmax(w) against a float64 numpy reference built from the
    # kernel's own w output. Tolerance covers the MXU's default (bf16-pass)
    # matmul precision for f32 operands.
    w_np = np.asarray(outputs["w"], dtype=np.float64)
    x_np = np.asarray(x, dtype=np.float64)
    sm = np.exp(w_np - w_np.max(axis=1, keepdims=True))
    sm = sm / sm.sum(axis=1, keepdims=True)
    mean_ref = x_np @ sm
    assert bool(jnp.all(jnp.isfinite(outputs["mean"])))
    assert np.allclose(np.asarray(outputs["mean"], np.float64), mean_ref,
                       atol=2e-2, rtol=2e-2)

    print("KERNEL_OK")
</pallas_src>

<mosaic_0001>
module attributes {stable_mosaic.version = 11 : i64} {
  func.func @kernel(%arg0: i32, %arg1: i32, %arg2: memref<8x16xf32, #tpu.memory_space<vmem>>, %arg3: memref<16x32xf32, #tpu.memory_space<vmem>>, %arg4: memref<16x32xf32, #tpu.memory_space<vmem>>, %arg5: memref<16x32xf32, #tpu.memory_space<vmem>>, %arg6: memref<1x8x32xf32, #tpu.memory_space<vmem>>, %arg7: memref<16x32xf32, #tpu.memory_space<vmem>>) attributes {dimension_semantics = [#tpu.dimension_semantics<parallel>, #tpu.dimension_semantics<arbitrary>], iteration_bounds = array<i64: 1, 1>, scalar_prefetch = 0 : i64, scratch_operands = 0 : i64, tpu.core_type = #tpu.core_type<tc>, window_params = [{transform_indices = @transform_0, window_bounds = array<i64: 8, 16>}, {transform_indices = @transform_1, window_bounds = array<i64: 16, 32>}, {transform_indices = @transform_2, window_bounds = array<i64: 16, 32>}, {transform_indices = @transform_3, window_bounds = array<i64: 16, 32>}, {transform_indices = @transform_4, window_bounds = array<i64: 1, 8, 32>}, {transform_indices = @transform_5, window_bounds = array<i64: 16, 32>}]} {
    %c1_i32 = arith.constant 1 : i32
    %0 = arith.muli %arg0, %c1_i32 : i32
    %1 = arith.addi %0, %arg1 : i32
    %c16_i32 = arith.constant 16 : i32
    %2 = arith.muli %1, %c16_i32 : i32
    %c0 = arith.constant 0 : index
    %c0_0 = arith.constant 0 : index
    %3 = vector.load %arg3[%c0, %c0_0] : memref<16x32xf32, #tpu.memory_space<vmem>>, vector<16x32xf32>
    %c0_1 = arith.constant 0 : index
    %c0_2 = arith.constant 0 : index
    %4 = vector.load %arg5[%c0_1, %c0_2] : memref<16x32xf32, #tpu.memory_space<vmem>>, vector<16x32xf32>
    %c0_3 = arith.constant 0 : index
    %c0_4 = arith.constant 0 : index
    %5 = vector.load %arg4[%c0_3, %c0_4] : memref<16x32xf32, #tpu.memory_space<vmem>>, vector<16x32xf32>
    %cst = arith.constant 5.000000e-01 : f32
    %6 = vector.broadcast %cst : f32 to vector<16x32xf32>
    %7 = arith.mulf %6, %5 : vector<16x32xf32>
    %8 = math.exp %7 : vector<16x32xf32>
    %9 = arith.mulf %4, %8 : vector<16x32xf32>
    %10 = arith.addf %3, %9 : vector<16x32xf32>
    %c0_5 = arith.constant 0 : index
    %c0_6 = arith.constant 0 : index
    %11 = vector.load %arg7[%c0_5, %c0_6] : memref<16x32xf32, #tpu.memory_space<vmem>>, vector<16x32xf32>
    tpu.vector_store %arg7[%c0_5, %c0_6], %10 {strides = array<i32>} : memref<16x32xf32, #tpu.memory_space<vmem>>, vector<16x32xf32>,
    %12 = tpu.iota {dimensions = array<i32: 0>} : vector<16x32xi32>
    %13 = vector.broadcast %2 : i32 to vector<16x32xi32>
    %14 = arith.addi %12, %13 : vector<16x32xi32>
    %c16_i32_7 = arith.constant 16 : i32
    %15 = vector.broadcast %c16_i32_7 : i32 to vector<16x32xi32>
    %16 = arith.cmpi slt, %14, %15 : vector<16x32xi32>
    %c0_8 = arith.constant 0 : index
    %c0_9 = arith.constant 0 : index
    %17 = vector.load %arg7[%c0_8, %c0_9] : memref<16x32xf32, #tpu.memory_space<vmem>>, vector<16x32xf32>
    %cst_10 = arith.constant 0.000000e+00 : f32
    %18 = vector.broadcast %cst_10 : f32 to vector<16x32xf32>
    %19 = arith.select %16, %17, %18 : vector<16x32xi1>, vector<16x32xf32>
    %cst_11 = arith.constant dense<0xFF800000> : vector<16xf32>
    %20 = vector.multi_reduction <maximumf>, %19, %cst_11 [1] : vector<16x32xf32> to vector<16xf32>
    %21 = vector.shape_cast %20 : vector<16xf32> to vector<16x1xf32>
    %22 = vector.broadcast %21 : vector<16x1xf32> to vector<16x32xf32>
    %23 = arith.subf %19, %22 : vector<16x32xf32>
    %24 = math.exp %23 : vector<16x32xf32>
    %cst_12 = arith.constant dense<0.000000e+00> : vector<16xf32>
    %25 = vector.multi_reduction <add>, %24, %cst_12 [1] : vector<16x32xf32> to vector<16xf32>
    %26 = vector.shape_cast %25 : vector<16xf32> to vector<16x1xf32>
    %cst_13 = arith.constant 1.000000e+00 : f32
    %27 = vector.broadcast %cst_13 : f32 to vector<16x1xf32>
    %28 = arith.divf %27, %26 : vector<16x1xf32>
    %29 = vector.broadcast %28 : vector<16x1xf32> to vector<16x32xf32>
    %30 = arith.mulf %24, %29 : vector<16x32xf32>
    %31 = tpu.iota {dimensions = array<i32: 1>} : vector<8x16xi32>
    %32 = vector.broadcast %2 : i32 to vector<8x16xi32>
    %33 = arith.addi %31, %32 : vector<8x16xi32>
    %c16_i32_14 = arith.constant 16 : i32
    %34 = vector.broadcast %c16_i32_14 : i32 to vector<8x16xi32>
    %35 = arith.cmpi slt, %33, %34 : vector<8x16xi32>
    %c0_15 = arith.constant 0 : index
    %c0_16 = arith.constant 0 : index
    %36 = vector.load %arg2[%c0_15, %c0_16] : memref<8x16xf32, #tpu.memory_space<vmem>>, vector<8x16xf32>
    %cst_17 = arith.constant 0.000000e+00 : f32
    %37 = vector.broadcast %cst_17 : f32 to vector<8x16xf32>
    %38 = arith.select %35, %36, %37 : vector<8x16xi1>, vector<8x16xf32>
    %c0_i32 = arith.constant 0 : i32
    %39 = arith.cmpi eq, %arg1, %c0_i32 : i32
    %40 = arith.extui %39 : i1 to i32
    %c0_i32_18 = arith.constant 0 : i32
    %41 = arith.cmpi ne, %40, %c0_i32_18 : i32
    scf.if %41 {
      %cst_26 = arith.constant 0.000000e+00 : f32
      %47 = vector.broadcast %cst_26 : f32 to vector<1x8x32xf32>
      %c0_27 = arith.constant 0 : index
      %c0_28 = arith.constant 0 : index
      %c0_29 = arith.constant 0 : index
      %48 = vector.load %arg6[%c0_27, %c0_28, %c0_29] : memref<1x8x32xf32, #tpu.memory_space<vmem>>, vector<1x8x32xf32>
      tpu.vector_store %arg6[%c0_27, %c0_28, %c0_29], %47 {strides = array<i32>} : memref<1x8x32xf32, #tpu.memory_space<vmem>>, vector<1x8x32xf32>,
    } else {
    }
    %c0_19 = arith.constant 0 : index
    %c0_20 = arith.constant 0 : index
    %c0_21 = arith.constant 0 : index
    %42 = vector.load %arg6[%c0_19, %c0_20, %c0_21] : memref<1x8x32xf32, #tpu.memory_space<vmem>>, vector<1x8x32xf32>
    %cst_22 = arith.constant dense<0.000000e+00> : vector<8x32xf32>
    %43 = tpu.matmul %38, %30, %cst_22 {dimension_numbers = #tpu.dot_dimension_numbers<[1], [0], [0], [1], [0, 0, 1, 1], [], []>} : vector<8x16xf32>, vector<16x32xf32>, vector<8x32xf32> -> vector<8x32xf32>
    %44 = vector.shape_cast %43 : vector<8x32xf32> to vector<1x8x32xf32>
    %45 = arith.addf %42, %44 : vector<1x8x32xf32>
    %c0_23 = arith.constant 0 : index
    %c0_24 = arith.constant 0 : index
    %c0_25 = arith.constant 0 : index
    %46 = vector.load %arg6[%c0_23, %c0_24, %c0_25] : memref<1x8x32xf32, #tpu.memory_space<vmem>>, vector<1x8x32xf32>
    tpu.vector_store %arg6[%c0_23, %c0_24, %c0_25], %45 {strides = array<i32>} : memref<1x8x32xf32, #tpu.memory_space<vmem>>, vector<1x8x32xf32>,
    return
  }
  func.func @transform_0(%arg0: i32, %arg1: i32) -> (i32, i32) {
    %c1_i32 = arith.constant 1 : i32
    %0 = arith.muli %arg0, %c1_i32 : i32
    %1 = arith.addi %0, %arg1 : i32
    %c0_i32 = arith.constant 0 : i32
    %2 = arith.minsi %1, %c0_i32 : i32
    %c0_i32_0 = arith.constant 0 : i32
    %c0_i32_1 = arith.constant 0 : i32
    return %c0_i32_0, %2 : i32, i32
  }
  func.func @transform_1(%arg0: i32, %arg1: i32) -> (i32, i32) {
    %c1_i32 = arith.constant 1 : i32
    %0 = arith.muli %arg0, %c1_i32 : i32
    %1 = arith.addi %0, %arg1 : i32
    %c0_i32 = arith.constant 0 : i32
    %2 = arith.minsi %1, %c0_i32 : i32
    %c0_i32_0 = arith.constant 0 : i32
    %c0_i32_1 = arith.constant 0 : i32
    return %2, %c0_i32_0 : i32, i32
  }
  func.func @transform_2(%arg0: i32, %arg1: i32) -> (i32, i32) {
    %c1_i32 = arith.constant 1 : i32
    %0 = arith.muli %arg0, %c1_i32 : i32
    %1 = arith.addi %0, %arg1 : i32
    %c0_i32 = arith.constant 0 : i32
    %2 = arith.minsi %1, %c0_i32 : i32
    %c0_i32_0 = arith.constant 0 : i32
    %c0_i32_1 = arith.constant 0 : i32
    return %2, %c0_i32_0 : i32, i32
  }
  func.func @transform_3(%arg0: i32, %arg1: i32) -> (i32, i32) {
    %c1_i32 = arith.constant 1 : i32
    %0 = arith.muli %arg0, %c1_i32 : i32
    %1 = arith.addi %0, %arg1 : i32
    %c0_i32 = arith.constant 0 : i32
    %2 = arith.minsi %1, %c0_i32 : i32
    %c0_i32_0 = arith.constant 0 : i32
    %c0_i32_1 = arith.constant 0 : i32
    return %2, %c0_i32_0 : i32, i32
  }
  func.func @transform_4(%arg0: i32, %arg1: i32) -> (i32, i32, i32) {
    %c0_i32 = arith.constant 0 : i32
    %c0_i32_0 = arith.constant 0 : i32
    %c0_i32_1 = arith.constant 0 : i32
    return %arg0, %c0_i32, %c0_i32_0 : i32, i32, i32
  }
  func.func @transform_5(%arg0: i32, %arg1: i32) -> (i32, i32) {
    %c1_i32 = arith.constant 1 : i32
    %0 = arith.muli %arg0, %c1_i32 : i32
    %1 = arith.addi %0, %arg1 : i32
    %c0_i32 = arith.constant 0 : i32
    %2 = arith.minsi %1, %c0_i32 : i32
    %c0_i32_0 = arith.constant 0 : i32
    %c0_i32_1 = arith.constant 0 : i32
    return %2, %c0_i32_0 : i32, i32
  }
}

</mosaic_0001>

<llo_original>
// kernel: decoder_forward.3
$region0: #{decoder_forward.3}
  #allocation0 [shape = 'u32[]', space=smem, size = 0x4, offset = 0x4, fixed_abs, tag = 'smem constant byte address 0x4 - core index']
  #allocation1 [shape = 'u32[144,128]{1,0:T(1,128)}', space=vmem, size = 0x12000, scoped, tag = 'internal scratch']
  %s0 = inlined_call_operand.vmem [shape: f32[8,16], index: 0, kind: input, shape index: {}]
  %s1 = inlined_call_operand.vmem [shape: f32[16,32], index: 1, kind: input, shape index: {}]
  %s2 = inlined_call_operand.vmem [shape: f32[16,32], index: 2, kind: input, shape index: {}]
  %s3 = inlined_call_operand.vmem [shape: f32[16,32], index: 3, kind: input, shape index: {}]
  %s4 = inlined_call_operand.hbm [shape: f32[1,8,32], index: 4, kind: output, shape index: {0}]
  %s5 = inlined_call_operand.hbm [shape: f32[16,32], index: 5, kind: output, shape index: {1}]
  %6 = xla_tuple %s4, %s5
  %s7 = sld [smem:[#allocation0]]
  $region38: #{decoder_forward.3} parent=0
    _
  %s9 = ssub.s32 1, %s7
  %s10 = scalar_select 0, %s9, %s7
  $region1: #{decoder_forward.3} parent=0
    #allocation2 [shape = 'u8[4096]{0}', space=vmem, size = 0x1000, scoped, tag = 'output window, operand 0, single buffered']
    #allocation3 [shape = 's32[1]{0}', space=sflag, size = 0x4, scoped, tag = 'scoped memory for decoder_forward.3']
    #allocation4 [shape = 'u8[8192]{0}', space=vmem, size = 0x2000, scoped, tag = 'output window, operand 1, single buffered']
    #allocation5 [shape = 's32[1]{0}', space=sflag, size = 0x4, scoped, tag = 'scoped memory for decoder_forward.3']
    %11 = vsyncpa [#allocation3], 0
    %12 = vsyncpa [#allocation5], 0
    // Predicated region
    $region2: #{decoder_forward.3} parent=1 // pred_check
      _
    $region3: #{decoder_forward.3} parent=1 // pred_check_branch
      %14 = sbr.rel (0) target = $region5
    $region4: #{decoder_forward.3} parent=1 // pred_region
      %s15 = sadd.s32 0, 0
      %p16 = scmp.lt.s32.totalorder %s15, 0
      %s17 = scalar_select %p16, %s15, 0
      %p18 = scmp.lt.s32.totalorder %s17, 0
      %s19 = scalar_select %p18, %s17, 0
      %s20 = smul.addr %s19, 8
      %s21 = scalar_lea.vmem %s0, %s20
      %s22 = sadd.s32 0, 0
      %p23 = scmp.lt.s32.totalorder %s22, 0
      %s24 = scalar_select %p23, %s22, 0
    $region5: #{decoder_forward.3} parent=1 // pred_fallthru
      _
    // Predicated region
    $region6: #{decoder_forward.3} parent=1 // pred_check
      _
    $region7: #{decoder_forward.3} parent=1 // pred_check_branch
      %26 = sbr.rel (0) target = $region9
    $region8: #{decoder_forward.3} parent=1 // pred_region
      %s27 = sadd.s32 0, 0
      %p28 = scmp.lt.s32.totalorder %s27, 0
      %s29 = scalar_select %p28, %s27, 0
      %s30 = smul.u32 2, %s29
      %p31 = scmp.lt.s32.totalorder %s30, 1
      %s32 = scalar_select %p31, %s30, 1
      %s33 = smul.addr %s32, 8
      %s34 = scalar_lea.vmem %s1, %s33
      %s35 = sadd.s32 0, 0
      %p36 = scmp.lt.s32.totalorder %s35, 0
      %s37 = scalar_select %p36, %s35, 0
      %s38 = smul.u32 2, %s37
    $region9: #{decoder_forward.3} parent=1 // pred_fallthru
      _
    // Predicated region
    $region10: #{decoder_forward.3} parent=1 // pred_check
      _
    $region11: #{decoder_forward.3} parent=1 // pred_check_branch
      %40 = sbr.rel (0) target = $region13
    $region12: #{decoder_forward.3} parent=1 // pred_region
      %s41 = sadd.s32 0, 0
      %p42 = scmp.lt.s32.totalorder %s41, 0
      %s43 = scalar_select %p42, %s41, 0
      %s44 = smul.u32 2, %s43
      %p45 = scmp.lt.s32.totalorder %s44, 1
      %s46 = scalar_select %p45, %s44, 1
      %s47 = smul.addr %s46, 8
      %s48 = scalar_lea.vmem %s2, %s47
      %s49 = sadd.s32 0, 0
      %p50 = scmp.lt.s32.totalorder %s49, 0
      %s51 = scalar_select %p50, %s49, 0
      %s52 = smul.u32 2, %s51
    $region13: #{decoder_forward.3} parent=1 // pred_fallthru
      _
    // Predicated region
    $region14: #{decoder_forward.3} parent=1 // pred_check
      _
    $region15: #{decoder_forward.3} parent=1 // pred_check_branch
      %54 = sbr.rel (0) target = $region17
    $region16: #{decoder_forward.3} parent=1 // pred_region
      %s55 = sadd.s32 0, 0
      %p56 = scmp.lt.s32.totalorder %s55, 0
      %s57 = scalar_select %p56, %s55, 0
      %s58 = smul.u32 2, %s57
      %p59 = scmp.lt.s32.totalorder %s58, 1
      %s60 = scalar_select %p59, %s58, 1
      %s61 = smul.addr %s60, 8
      %s62 = scalar_lea.vmem %s3, %s61
      %s63 = sadd.s32 0, 0
      %p64 = scmp.lt.s32.totalorder %s63, 0
      %s65 = scalar_select %p64, %s63, 0
      %s66 = smul.u32 2, %s65
    $region17: #{decoder_forward.3} parent=1 // pred_fallthru
      _
    %s67 = sadd.s32 0, 0
    %p68 = scmp.lt.s32.totalorder %s67, 0
    %s69 = scalar_select %p68, %s67, 0
    %p70 = scmp.lt.s32.totalorder %s69, 0
    %s71 = scalar_select %p70, %s69, 0
    %s72 = smul.addr %s71, 8
    %s73 = scalar_lea.vmem %s0, %s72
    %s74 = sadd.s32 0, 0
    %p75 = scmp.lt.s32.totalorder %s74, 0
    %s76 = scalar_select %p75, %s74, 0
    %s77 = smul.u32 2, %s76
    %p78 = scmp.lt.s32.totalorder %s77, 1
    %s79 = scalar_select %p78, %s77, 1
    %s80 = smul.addr %s79, 8
    %s81 = scalar_lea.vmem %s1, %s80
    %s82 = sadd.s32 0, 0
    %p83 = scmp.lt.s32.totalorder %s82, 0
    %s84 = scalar_select %p83, %s82, 0
    %s85 = smul.u32 2, %s84
    %p86 = scmp.lt.s32.totalorder %s85, 1
    %s87 = scalar_select %p86, %s85, 1
    %s88 = smul.addr %s87, 8
    %s89 = scalar_lea.vmem %s2, %s88
    %s90 = sadd.s32 0, 0
    %p91 = scmp.lt.s32.totalorder %s90, 0
    %s92 = scalar_select %p91, %s90, 0
    %s93 = smul.u32 2, %s92
    %p94 = scmp.lt.s32.totalorder %s93, 1
    %s95 = scalar_select %p94, %s93, 1
    %s96 = smul.addr %s95, 8
    %s97 = scalar_lea.vmem %s3, %s96
    %s98 = sadd.s32 0, 0
    %p99 = scmp.lt.s32.totalorder %s98, 0
    %s100 = scalar_select %p99, %s98, 0
    %p101 = scmp.lt.s32.totalorder %s100, 0
    %s102 = scalar_select %p101, %s100, 0
    %s103 = smul.addr %s102, 8
    %s104 = scalar_lea.vmem %s0, %s103
    %s105 = sadd.s32 0, 0
    %p106 = scmp.lt.s32.totalorder %s105, 0
    %s107 = scalar_select %p106, %s105, 0
    %s108 = sadd.s32 0, 0
    %p109 = scmp.lt.s32.totalorder %s108, 0
    %s110 = scalar_select %p109, %s108, 0
    %s111 = smul.u32 2, %s110
    %p112 = scmp.lt.s32.totalorder %s111, 1
    %s113 = scalar_select %p112, %s111, 1
    %s114 = smul.addr %s113, 8
    %s115 = scalar_lea.vmem %s1, %s114
    %s116 = sadd.s32 0, 0
    %p117 = scmp.lt.s32.totalorder %s116, 0
    %s118 = scalar_select %p117, %s116, 0
    %s119 = smul.u32 2, %s118
    %s120 = sadd.s32 0, 0
    %p121 = scmp.lt.s32.totalorder %s120, 0
    %s122 = scalar_select %p121, %s120, 0
    %s123 = smul.u32 2, %s122
    %p124 = scmp.lt.s32.totalorder %s123, 1
    %s125 = scalar_select %p124, %s123, 1
    %s126 = smul.addr %s125, 8
    %s127 = scalar_lea.vmem %s2, %s126
    %s128 = sadd.s32 0, 0
    %p129 = scmp.lt.s32.totalorder %s128, 0
    %s130 = scalar_select %p129, %s128, 0
    %s131 = smul.u32 2, %s130
    %s132 = sadd.s32 0, 0
    %p133 = scmp.lt.s32.totalorder %s132, 0
    %s134 = scalar_select %p133, %s132, 0
    %s135 = smul.u32 2, %s134
    %p136 = scmp.lt.s32.totalorder %s135, 1
    %s137 = scalar_select %p136, %s135, 1
    %s138 = smul.addr %s137, 8
    %s139 = scalar_lea.vmem %s3, %s138
    %s140 = sadd.s32 0, 0
    %p141 = scmp.lt.s32.totalorder %s140, 0
    %s142 = scalar_select %p141, %s140, 0
    %s143 = smul.u32 2, %s142
    %s144 = sadd.s32 0, 0
    %p145 = scmp.lt.s32.totalorder %s144, 0
    %s146 = scalar_select %p145, %s144, 0
    %s147 = smul.u32 2, %s146
    %s148 = sadd.s32 0, 0
    %s149 = smul.u32 %s148, 16
    %v150 = vld [vmem:[%s115] sm:$0xff]
    %v151 = vld [vmem:[%s115 + $0x8] sm:$0xff]
    %v152 = vld [vmem:[%s139] sm:$0xff]
    %v153 = vld [vmem:[%s139 + $0x8] sm:$0xff]
    %v154 = vld [vmem:[%s127] sm:$0xff]
    %v155 = vld [vmem:[%s127 + $0x8] sm:$0xff]
    %v156 = vmul.f32 %v154, 0.5
    %v157 = vmul.f32 %v155, 0.5
    %v158 = vmul.f32 %v156, 1.442695
    %v159 = vpow.pop %v158
    %v160 = vmul.f32 %v157, 1.442695
    %v161 = vpow.pop %v160
    %v162 = vmul.f32 %v152, %v159
    %v163 = vmul.f32 %v153, %v161
    %v164 = vadd.f32 %v150, %v162
    %v165 = vadd.f32 %v151, %v163
    %vm166 = vcmask 261120
    %167 = vst.msk [vmem:[#allocation4] sm:$0xff] %vm166, %v164
    %168 = vst.msk [vmem:[#allocation4 + $0x8] sm:$0xff] %vm166, %v165
    %v169 = vlaneseq
    %v170 = vshrl.u32 %v169, 7
    %v171 = vadd.s32 %v170, 8
    %v172 = vstv %s149
    %v173 = vadd.s32 %v170, %v172
    %v174 = vadd.s32 %v171, %v172
    %vm175 = vcmp.lt.s32.totalorder %v173, 16
    %vm176 = vcmp.lt.s32.totalorder %v174, 16
    %v177 = vld [vmem:[#allocation4] sm:$0xff]
    %v178 = vld [vmem:[#allocation4 + $0x8] sm:$0xff]
    %v179 = vsel %vm175, %v177, 0.0
    %v180 = vsel %vm176, %v178, 0.0
    %v181 = vsel %vm166, %v179, -inf
    %182 = vmax.xlane.f32.xlu0 %v181
    %v183 = vpop.xlane.xlu0 %182
    %v184 = vsel %vm166, %v180, -inf
    %185 = vmax.xlane.f32.xlu0 %v184
    %v186 = vpop.xlane.xlu0 %185
    %v187 = vsub.f32 %v179, %v183
    %v188 = vsub.f32 %v180, %v186
    %v189 = vmul.f32 %v187, 1.442695
    %v190 = vpow.pop %v189
    %v191 = vmul.f32 %v188, 1.442695
    %v192 = vpow.pop %v191
    %v193 = vsel %vm166, %v190, 0.0
    %194 = vadd.xlane.f32.xlu0 %v193
    %v195 = vpop.xlane.xlu0 %194
    %v196 = vsel %vm166, %v192, 0.0
    %197 = vadd.xlane.f32.xlu0 %v196
    %v198 = vpop.xlane.xlu0 %197
    %v199 = vrcp.pop %v195
    %v200 = vmul.f32 1.0, %v199
    %v201 = vrcp.pop %v198
    %v202 = vmul.f32 1.0, %v201
    %v203 = vmul.f32 %v190, %v200
    %v204 = vmul.f32 %v192, %v202
    %v205 = vlaneseq
    %v206 = vand.u32 %v205, 127
    %v207 = vadd.s32 %v206, %v172
    %vm208 = vcmp.lt.s32.totalorder %v207, 16
    %v209 = vld [vmem:[%s104] sm:$0xff]
    %v210 = vsel %vm208, %v209, 0.0
    %p211 = scmp.eq.s32.totalorder 0, 0
    // Predicated region
    $region18: #{decoder_forward.3} parent=1 // pred_check
      %p212 = pneg %p211
    $region19: #{decoder_forward.3} parent=1 // pred_check_branch
      %214 = sbr.rel (%p212) target = $region21
    $region20: #{decoder_forward.3} parent=1 // pred_region
      %215 = vst.msk [vmem:[#allocation2] sm:$0xff] %vm166, 0.0
    $region21: #{decoder_forward.3} parent=1 // pred_fallthru
      _
    %v216 = vld [vmem:[#allocation2] sm:$0xff]
    %vm217 = vcmask 130048
    %v219 = vsel %vm217, %v210, 0
    %221 = vmatprep.subr.mxu0 0.0
    %222 = vmatpush1.msra.mxu0 %v203
    %223 = vmatprep.subr.mxu0 0.0
    %224 = vmatpush1.msra.mxu0 %v204
    %225 = vmatprep.subr.mxu0 0.0
    %226 = vmatpush1.msra.mxu0 0.0
    %227 = vmatprep.subr.mxu0 0.0
    %228 = vmatpush1.msra.mxu0 0.0
    %229 = vmatprep.subr.mxu0 0.0
    %230 = vmatpush1.msra.mxu0 0.0
    %231 = vmatprep.subr.mxu0 0.0
    %232 = vmatpush1.msra.mxu0 0.0
    %233 = vmatprep.subr.mxu0 0.0
    %234 = vmatpush1.msra.mxu0 0.0
    %235 = vmatprep.subr.mxu0 0.0
    %236 = vmatpush1.msra.mxu0 0.0
    %237 = vmatprep.subr.mxu0 0.0
    %238 = vmatpush1.msra.mxu0 0.0
    %239 = vmatprep.subr.mxu0 0.0
    %240 = vmatpush1.msra.mxu0 0.0
    %241 = vmatprep.subr.mxu0 0.0
    %242 = vmatpush1.msra.mxu0 0.0
    %243 = vmatprep.subr.mxu0 0.0
    %244 = vmatpush1.msra.mxu0 0.0
    %245 = vmatprep.subr.mxu0 0.0
    %246 = vmatpush1.msra.mxu0 0.0
    %247 = vmatprep.subr.mxu0 0.0
    %248 = vmatpush1.msra.mxu0 0.0
    %249 = vmatprep.subr.mxu0 0.0
    %250 = vmatpush1.msra.mxu0 0.0
    %251 = vmatprep.subr.mxu0 0.0
    %252 = vmatpush1.msra.mxu0 0.0
    %253 = vmatprep.subr.mxu0 0.0
    %254 = vmatpush1.msra.mxu0 0.0
    %255 = vmatprep.subr.mxu0 0.0
    %256 = vmatpush1.msra.mxu0 0.0
    %257 = vmatprep.subr.mxu0 0.0
    %258 = vmatpush1.msra.mxu0 0.0
    %259 = vmatprep.subr.mxu0 0.0
    %260 = vmatpush1.msra.mxu0 0.0
    %261 = vmatprep.subr.mxu0 0.0
    %262 = vmatpush1.msra.mxu0 0.0
    %263 = vmatprep.subr.mxu0 0.0
    %264 = vmatpush1.msra.mxu0 0.0
    %265 = vmatprep.subr.mxu0 0.0
    %266 = vmatpush1.msra.mxu0 0.0
    %267 = vmatprep.subr.mxu0 0.0
    %268 = vmatpush1.msra.mxu0 0.0
    %269 = vmatprep.subr.mxu0 0.0
    %270 = vmatpush1.msra.mxu0 0.0
    %271 = vmatprep.subr.mxu0 0.0
    %272 = vmatpush1.msra.mxu0 0.0
    %273 = vmatprep.subr.mxu0 0.0
    %274 = vmatpush1.msra.mxu0 0.0
    %275 = vmatprep.subr.mxu0 0.0
    %276 = vmatpush1.msra.mxu0 0.0
    %277 = vmatprep.subr.mxu0 0.0
    %278 = vmatpush1.msra.mxu0 0.0
    %279 = vmatprep.subr.mxu0 0.0
    %280 = vmatpush1.msra.mxu0 0.0
    %281 = vmatprep.subr.mxu0 0.0
    %282 = vmatpush1.msra.mxu0 0.0
    %283 = vmatprep.subr.mxu0 0.0
    %284 = vmatpush1.msra.mxu0 0.0
    %285 = vmatprep.mubr.f32.mxu0 0.0
    %286 = vmatmul.mubr.f32.gmra.mrb[0].mxu0 %v219
    %v287 = vpop.f32.mrb[0].mxu0
    %v288 = vadd.f32 0.0, %v287
    %v289 = vpop.f32.mrb[0].mxu0
    %290 = vdwg.mxu0
    %v291 = vadd.f32 %v216, %v288
    %292 = vst.msk [vmem:[#allocation2] sm:$0xff] %vm166, %v291
    // Predicated region
    $region22: #{decoder_forward.3} parent=1 // pred_check
      _
    $region23: #{decoder_forward.3} parent=1 // pred_check_branch
      %294 = sbr.rel (0) target = $region25
    $region24: #{decoder_forward.3} parent=1 // pred_region
      %s296 = ssub.s32 128, 128
      %297 = vsyncadd [#allocation3], %s296
      %s299 = sshll.u32 [#allocation2], 4
      %s300 = int_to_ptr.vmem [resolvable:$true] %s299
      %302 = dma.vmem_to_hbm [thread:$0]  %s300, 128, %s4, [#allocation3]
    $region25: #{decoder_forward.3} parent=1 // pred_fallthru
      _
    // Predicated region
    $region26: #{decoder_forward.3} parent=1 // pred_check
      _
    $region27: #{decoder_forward.3} parent=1 // pred_check_branch
      %304 = sbr.rel (0) target = $region29
    $region28: #{decoder_forward.3} parent=1 // pred_region
      %s305 = sadd.s32 0, 0
      %p306 = scmp.lt.s32.totalorder %s305, 0
      %s307 = scalar_select %p306, %s305, 0
      %s308 = smul.u32 2, %s307
      %s310 = ssub.s32 256, 256
      %311 = vsyncadd [#allocation5], %s310
      %s312 = smul.addr %s308, 128
      %s313 = scalar_lea.hbm %s5, %s312
      %s314 = sshll.u32 [#allocation4], 4
      %s315 = int_to_ptr.vmem [resolvable:$true] %s314
      %320 = dma.vmem_to_hbm [thread:$0]  %s315, 256, %s313, [#allocation5], 128, 128, 8
    $region29: #{decoder_forward.3} parent=1 // pred_fallthru
      _
    // Predicated region
    $region30: #{decoder_forward.3} parent=1 // pred_check
      _
    $region31: #{decoder_forward.3} parent=1 // pred_check_branch
      %322 = sbr.rel (0) target = $region33
    $region32: #{decoder_forward.3} parent=1 // pred_region
      %323 = dma.done [#allocation3], 128
    $region33: #{decoder_forward.3} parent=1 // pred_fallthru
      _
    // Predicated region
    $region34: #{decoder_forward.3} parent=1 // pred_check
      _
    $region35: #{decoder_forward.3} parent=1 // pred_check_branch
      %325 = sbr.rel (0) target = $region37
    $region36: #{decoder_forward.3} parent=1 // pred_region
      %326 = dma.done [#allocation5], 256
    $region37: #{decoder_forward.3} parent=1 // pred_fallthru
      _
    %327 = vsyncpa [#allocation3], 1
    %328 = vsyncpa [#allocation5], 1

</llo_original>
